<compile_context>
chip_gen: v5e
topology: v5e:2x2
jax: 0.10.0
libtpu: 0.0.40
codegen_flags: <defaults>
</compile_context>

<pallas_src>
import functools

import numpy as np
import jax
import jax.numpy as jnp
from jax.experimental import pallas as pl
from jax.experimental.pallas import tpu as pltpu


_LANE = 128


def _round_up(x, m):
    return ((x + m - 1) // m) * m


def _vmem_capacity_bytes():
    try:
        return int(pltpu.get_tpu_info().vmem_capacity_bytes)
    except Exception:
        return 64 << 20  # v7x lower bound -> safe on every generation


# ---------------------------------------------------------------------------
# Kernel 1: build the (L, L) row-normalized Gaussian smoothing matrix once,
# tiled over row blocks (each row block normalizes its own rows -> identical
# math to the untiled version).
# ---------------------------------------------------------------------------
def _build_w_kernel(coef_ref, alpha_ref, w_ref, *, embed_dim, tm):
    TM, L = w_ref.shape
    row0 = pl.program_id(0) * tm
    trow = jax.lax.broadcasted_iota(jnp.int32, (TM, L), 0) + row0
    tcol = jax.lax.broadcasted_iota(jnp.int32, (TM, L), 1)
    diff = (trow - tcol).astype(jnp.float32)
    d2 = diff * diff

    def accum(e, w):
        coef = coef_ref[e]                             # -0.5 / sigma_e^2 (SMEM)
        alp = alpha_ref[e]                             # mixing weight    (SMEM)
        Ke = jnp.exp(d2 * coef)                        # EUP
        rowsum = jnp.sum(Ke, axis=1, keepdims=True)    # XLU, (TM, 1)
        return w + Ke * (alp / rowsum)                 # exact row normalization

    w = jnp.zeros((TM, L), jnp.float32)
    if embed_dim <= 32:                                # small & static -> unroll
        for e in range(embed_dim):
            w = accum(e, w)
    else:                                              # bound live ranges
        w = jax.lax.fori_loop(0, embed_dim, accum, w)
    w_ref[...] = w


def _build_w(L, sigmas, alphas):
    E = int(sigmas.shape[0])
    coef = -0.5 / (sigmas.astype(jnp.float32) ** 2)    # scalar precompute
    alphas = alphas.astype(jnp.float32)

    if L <= 512:
        TM = L                                         # full-extent block dim
    elif L <= 2048:
        TM = 256
    else:
        TM = 128

    cp_kwargs = dict(dimension_semantics=("parallel",))
    est = 8 * 4 * TM * L                               # out dbl-buf + f32 temps
    if est > (16 << 20):
        cp_kwargs["vmem_limit_bytes"] = min(est, int(0.85 * _vmem_capacity_bytes()))

    return pl.pallas_call(
        functools.partial(_build_w_kernel, embed_dim=E, tm=TM),
        out_shape=jax.ShapeDtypeStruct((L, L), jnp.float32),
        grid=(pl.cdiv(L, TM),),
        in_specs=[
            pl.BlockSpec(memory_space=pltpu.MemorySpace.SMEM),   # coef
            pl.BlockSpec(memory_space=pltpu.MemorySpace.SMEM),   # alphas
        ],
        out_specs=pl.BlockSpec((TM, L), lambda i: (i, 0)),
        compiler_params=pltpu.CompilerParams(**cp_kwargs),
    )(coef, alphas)


# ---------------------------------------------------------------------------
# Kernel 2: lane-dense smoothing   out[:, tile] = minmax(W @ X[:, tile]).
# W stays resident in VMEM across the whole N grid (index_map -> (0, 0)).
# ---------------------------------------------------------------------------
def _smooth_kernel(w_ref, x_ref, o_ref, *, norm_flag, eps):
    s = jnp.dot(w_ref[...], x_ref[...],
                preferred_element_type=jnp.float32)    # MXU, f32 accumulation
    if norm_flag:
        mn = jnp.min(s, axis=0, keepdims=True)         # (1, TN)
        mx = jnp.max(s, axis=0, keepdims=True)         # (1, TN)
        s = (s - mn) / (mx - mn + eps)                 # exact divide (free: DMA-bound)
    o_ref[...] = s.astype(o_ref.dtype)                 # single dense store


# ---------------------------------------------------------------------------
# Wrapper
# ---------------------------------------------------------------------------
def cagke_u_forward(X, type_flag, sigmas, alphas, *, norm_flag=True, eps=1e-8,
                    slab_dtype=jnp.float32):
    """CAGKE_U forward.

    X:         (B, L, P) float32.
    type_flag: (P,) bool -- True = continuous (exact pass-through),
               False = discrete (CAGKE smoothing).  MUST be static/host data
               (the reference module drives Python-level control flow with it).
    sigmas / alphas: (E,) float32 Gaussian bandwidths / mixing weights.
    slab_dtype: jnp.bfloat16 halves HBM traffic of the smoothing pass
               (cast done wrapper-side); default f32 preserves numerics.
    """
    X = X.astype(jnp.float32)
    B, L, P = X.shape

    tf = np.asarray(type_flag, dtype=bool)             # static, by construction
    disc_idx = np.nonzero(~tf)[0]
    cont_idx = np.nonzero(tf)[0]
    Pd = int(disc_idx.size)
    if Pd == 0:                                        # nothing to smooth
        return X

    # Batch-independent smoothing matrix, built once.
    W = _build_w(L, jnp.asarray(sigmas), jnp.asarray(alphas))
    if slab_dtype != jnp.float32:
        W = W.astype(slab_dtype)

    # Gather discrete columns + fuse batch into a lane-dense N axis.
    Xd = X[:, :, disc_idx]                                       # (B, L, Pd)
    slab = jnp.transpose(Xd, (1, 0, 2)).reshape(L, B * Pd).astype(slab_dtype)
    N = B * Pd
    itemsize = jnp.dtype(slab_dtype).itemsize

    # --- TN selection: ~2 MiB input tile (multiple of 128 lanes), at least 2
    # grid steps when possible (v7x megacore), shrunk to fit the VMEM cap. ---
    N128 = _round_up(N, _LANE)
    tn = max(_LANE, ((2 << 20) // (itemsize * L) // _LANE) * _LANE)
    half = (N128 // 2 // _LANE) * _LANE
    if half >= _LANE:
        tn = min(tn, half)                              # >= 2 grid steps
    tn = min(tn, N128)

    cap = int(0.85 * _vmem_capacity_bytes())

    def _budget(t):
        return (2 * 4 * L * L                          # W, double-buffered
                + 2 * 2 * itemsize * L * t             # input tile, dbl-buffered
                + 2 * 2 * 4 * L * t                    # f32 acc / out, dbl-buffered
                + (2 << 20))                           # headroom

    while _budget(tn) > cap and tn > _LANE:
        tn = max(_LANE, (tn // 2 // _LANE) * _LANE)

    N_pad = _round_up(N, tn)
    if N_pad != N:
        slab = jnp.pad(slab, ((0, 0), (0, N_pad - N)))

    cp_kwargs = dict(dimension_semantics=("parallel",))
    budget = _budget(tn)
    if budget > (16 << 20):                            # v5e default scoped VMEM
        cp_kwargs["vmem_limit_bytes"] = min(budget, cap)

    smoothed = pl.pallas_call(
        functools.partial(_smooth_kernel, norm_flag=norm_flag, eps=eps),
        out_shape=jax.ShapeDtypeStruct((L, N_pad), slab_dtype),
        grid=(N_pad // tn,),
        in_specs=[
            pl.BlockSpec((L, L), lambda n: (0, 0)),    # W: DMA'd once, resident
            pl.BlockSpec((L, tn), lambda n: (0, n)),   # input slab tile
        ],
        out_specs=pl.BlockSpec((L, tn), lambda n: (0, n)),
        compiler_params=pltpu.CompilerParams(**cp_kwargs),
    )(W, slab)

    # Static column permutation (no scatter): concat [smoothed, continuous]
    # then reorder once with a constant index vector.
    sm = smoothed[:, :N].reshape(L, B, Pd).transpose(1, 0, 2).astype(jnp.float32)
    parts, order = [sm], [disc_idx]
    if cont_idx.size:
        parts.append(X[:, :, cont_idx])
        order.append(cont_idx)
    combined = jnp.concatenate(parts, axis=-1) if len(parts) > 1 else parts[0]
    inv = np.argsort(np.concatenate(order))
    if not np.array_equal(inv, np.arange(P)):
        combined = jnp.take(combined, jnp.asarray(inv), axis=-1)
    return combined


if __name__ == "__main__":
    key = jax.random.PRNGKey(0)
    B, L, P, E = 2, 16, 4, 8
    sigma_min, sigma_max = 0.4, 4.0

    k1, k2 = jax.random.split(key)
    X_cont = jax.random.normal(k1, (B, L, P), dtype=jnp.float32)
    X_disc = jax.random.randint(k2, (B, L, P), 0, 4).astype(jnp.float32)

    # type_flag[i] True -> continuous column (copied), False -> discrete (CAGKE).
    type_flag = np.array([True, False, True, False])
    X = jnp.where(jnp.asarray(type_flag)[None, None, :], X_cont, X_disc)

    # Deterministic CAGKE parameter init: bandwidths spread over
    # [sigma_min, sigma_max], mixing weights = softmax(zeros) = uniform.
    sigmas = jnp.linspace(sigma_min, sigma_max, E).astype(jnp.float32)
    alphas = jnp.full((E,), 1.0 / E, dtype=jnp.float32)

    out = cagke_u_forward(X, type_flag, sigmas, alphas, norm_flag=True)
    jax.block_until_ready(out)

    assert out.shape == (B, L, P)
    assert bool(jnp.all(jnp.isfinite(out)))
    # Continuous columns must be exact pass-through.
    assert bool(jnp.allclose(out[:, :, 0], X[:, :, 0]))
    assert bool(jnp.allclose(out[:, :, 2], X[:, :, 2]))
    # Discrete columns are min-max normalized -> values within [0, 1].
    assert bool(jnp.all((out[:, :, 1] >= -1e-5) & (out[:, :, 1] <= 1.0 + 1e-5)))
    assert bool(jnp.all((out[:, :, 3] >= -1e-5) & (out[:, :, 3] <= 1.0 + 1e-5)))
    print("KERNEL_OK")
</pallas_src>

<mosaic_0001>
module attributes {stable_mosaic.version = 11 : i64} {
  func.func @_build_w_kernel(%arg0: i32, %arg1: memref<8xf32, #tpu.memory_space<smem>>, %arg2: memref<8xf32, #tpu.memory_space<smem>>, %arg3: memref<16x16xf32, #tpu.memory_space<vmem>>) attributes {dimension_semantics = [#tpu.dimension_semantics<parallel>], iteration_bounds = array<i64: 1>, scalar_prefetch = 0 : i64, scratch_operands = 0 : i64, tpu.core_type = #tpu.core_type<tc>, window_params = [{transform_indices = @transform_0, window_bounds = array<i64: 8>}, {transform_indices = @transform_1, window_bounds = array<i64: 8>}, {transform_indices = @transform_2, window_bounds = array<i64: 16, 16>}]} {
    %c16_i32 = arith.constant 16 : i32
    %0 = arith.muli %arg0, %c16_i32 : i32
    %1 = tpu.iota {dimensions = array<i32: 0>} : vector<16x16xi32>
    %2 = vector.broadcast %0 : i32 to vector<16x16xi32>
    %3 = arith.addi %1, %2 : vector<16x16xi32>
    %4 = tpu.iota {dimensions = array<i32: 1>} : vector<16x16xi32>
    %5 = arith.subi %3, %4 : vector<16x16xi32>
    %6 = arith.sitofp %5 : vector<16x16xi32> to vector<16x16xf32>
    %7 = arith.mulf %6, %6 : vector<16x16xf32>
    %cst = arith.constant 0.000000e+00 : f32
    %8 = vector.broadcast %cst : f32 to vector<16x16xf32>
    %c0 = arith.constant 0 : index
    %9 = memref.load %arg1[%c0] : memref<8xf32, #tpu.memory_space<smem>>
    %c0_0 = arith.constant 0 : index
    %10 = memref.load %arg2[%c0_0] : memref<8xf32, #tpu.memory_space<smem>>
    %11 = vector.broadcast %9 : f32 to vector<16x16xf32>
    %12 = arith.mulf %7, %11 : vector<16x16xf32>
    %13 = math.exp %12 : vector<16x16xf32>
    %cst_1 = arith.constant dense<0.000000e+00> : vector<16xf32>
    %14 = vector.multi_reduction <add>, %13, %cst_1 [1] : vector<16x16xf32> to vector<16xf32>
    %15 = vector.shape_cast %14 : vector<16xf32> to vector<16x1xf32>
    %16 = vector.broadcast %10 : f32 to vector<16x1xf32>
    %17 = arith.divf %16, %15 : vector<16x1xf32>
    %18 = vector.broadcast %17 : vector<16x1xf32> to vector<16x16xf32>
    %19 = arith.mulf %13, %18 : vector<16x16xf32>
    %20 = arith.addf %8, %19 : vector<16x16xf32>
    %c1 = arith.constant 1 : index
    %21 = memref.load %arg1[%c1] : memref<8xf32, #tpu.memory_space<smem>>
    %c1_2 = arith.constant 1 : index
    %22 = memref.load %arg2[%c1_2] : memref<8xf32, #tpu.memory_space<smem>>
    %23 = vector.broadcast %21 : f32 to vector<16x16xf32>
    %24 = arith.mulf %7, %23 : vector<16x16xf32>
    %25 = math.exp %24 : vector<16x16xf32>
    %cst_3 = arith.constant dense<0.000000e+00> : vector<16xf32>
    %26 = vector.multi_reduction <add>, %25, %cst_3 [1] : vector<16x16xf32> to vector<16xf32>
    %27 = vector.shape_cast %26 : vector<16xf32> to vector<16x1xf32>
    %28 = vector.broadcast %22 : f32 to vector<16x1xf32>
    %29 = arith.divf %28, %27 : vector<16x1xf32>
    %30 = vector.broadcast %29 : vector<16x1xf32> to vector<16x16xf32>
    %31 = arith.mulf %25, %30 : vector<16x16xf32>
    %32 = arith.addf %20, %31 : vector<16x16xf32>
    %c2 = arith.constant 2 : index
    %33 = memref.load %arg1[%c2] : memref<8xf32, #tpu.memory_space<smem>>
    %c2_4 = arith.constant 2 : index
    %34 = memref.load %arg2[%c2_4] : memref<8xf32, #tpu.memory_space<smem>>
    %35 = vector.broadcast %33 : f32 to vector<16x16xf32>
    %36 = arith.mulf %7, %35 : vector<16x16xf32>
    %37 = math.exp %36 : vector<16x16xf32>
    %cst_5 = arith.constant dense<0.000000e+00> : vector<16xf32>
    %38 = vector.multi_reduction <add>, %37, %cst_5 [1] : vector<16x16xf32> to vector<16xf32>
    %39 = vector.shape_cast %38 : vector<16xf32> to vector<16x1xf32>
    %40 = vector.broadcast %34 : f32 to vector<16x1xf32>
    %41 = arith.divf %40, %39 : vector<16x1xf32>
    %42 = vector.broadcast %41 : vector<16x1xf32> to vector<16x16xf32>
    %43 = arith.mulf %37, %42 : vector<16x16xf32>
    %44 = arith.addf %32, %43 : vector<16x16xf32>
    %c3 = arith.constant 3 : index
    %45 = memref.load %arg1[%c3] : memref<8xf32, #tpu.memory_space<smem>>
    %c3_6 = arith.constant 3 : index
    %46 = memref.load %arg2[%c3_6] : memref<8xf32, #tpu.memory_space<smem>>
    %47 = vector.broadcast %45 : f32 to vector<16x16xf32>
    %48 = arith.mulf %7, %47 : vector<16x16xf32>
    %49 = math.exp %48 : vector<16x16xf32>
    %cst_7 = arith.constant dense<0.000000e+00> : vector<16xf32>
    %50 = vector.multi_reduction <add>, %49, %cst_7 [1] : vector<16x16xf32> to vector<16xf32>
    %51 = vector.shape_cast %50 : vector<16xf32> to vector<16x1xf32>
    %52 = vector.broadcast %46 : f32 to vector<16x1xf32>
    %53 = arith.divf %52, %51 : vector<16x1xf32>
    %54 = vector.broadcast %53 : vector<16x1xf32> to vector<16x16xf32>
    %55 = arith.mulf %49, %54 : vector<16x16xf32>
    %56 = arith.addf %44, %55 : vector<16x16xf32>
    %c4 = arith.constant 4 : index
    %57 = memref.load %arg1[%c4] : memref<8xf32, #tpu.memory_space<smem>>
    %c4_8 = arith.constant 4 : index
    %58 = memref.load %arg2[%c4_8] : memref<8xf32, #tpu.memory_space<smem>>
    %59 = vector.broadcast %57 : f32 to vector<16x16xf32>
    %60 = arith.mulf %7, %59 : vector<16x16xf32>
    %61 = math.exp %60 : vector<16x16xf32>
    %cst_9 = arith.constant dense<0.000000e+00> : vector<16xf32>
    %62 = vector.multi_reduction <add>, %61, %cst_9 [1] : vector<16x16xf32> to vector<16xf32>
    %63 = vector.shape_cast %62 : vector<16xf32> to vector<16x1xf32>
    %64 = vector.broadcast %58 : f32 to vector<16x1xf32>
    %65 = arith.divf %64, %63 : vector<16x1xf32>
    %66 = vector.broadcast %65 : vector<16x1xf32> to vector<16x16xf32>
    %67 = arith.mulf %61, %66 : vector<16x16xf32>
    %68 = arith.addf %56, %67 : vector<16x16xf32>
    %c5 = arith.constant 5 : index
    %69 = memref.load %arg1[%c5] : memref<8xf32, #tpu.memory_space<smem>>
    %c5_10 = arith.constant 5 : index
    %70 = memref.load %arg2[%c5_10] : memref<8xf32, #tpu.memory_space<smem>>
    %71 = vector.broadcast %69 : f32 to vector<16x16xf32>
    %72 = arith.mulf %7, %71 : vector<16x16xf32>
    %73 = math.exp %72 : vector<16x16xf32>
    %cst_11 = arith.constant dense<0.000000e+00> : vector<16xf32>
    %74 = vector.multi_reduction <add>, %73, %cst_11 [1] : vector<16x16xf32> to vector<16xf32>
    %75 = vector.shape_cast %74 : vector<16xf32> to vector<16x1xf32>
    %76 = vector.broadcast %70 : f32 to vector<16x1xf32>
    %77 = arith.divf %76, %75 : vector<16x1xf32>
    %78 = vector.broadcast %77 : vector<16x1xf32> to vector<16x16xf32>
    %79 = arith.mulf %73, %78 : vector<16x16xf32>
    %80 = arith.addf %68, %79 : vector<16x16xf32>
    %c6 = arith.constant 6 : index
    %81 = memref.load %arg1[%c6] : memref<8xf32, #tpu.memory_space<smem>>
    %c6_12 = arith.constant 6 : index
    %82 = memref.load %arg2[%c6_12] : memref<8xf32, #tpu.memory_space<smem>>
    %83 = vector.broadcast %81 : f32 to vector<16x16xf32>
    %84 = arith.mulf %7, %83 : vector<16x16xf32>
    %85 = math.exp %84 : vector<16x16xf32>
    %cst_13 = arith.constant dense<0.000000e+00> : vector<16xf32>
    %86 = vector.multi_reduction <add>, %85, %cst_13 [1] : vector<16x16xf32> to vector<16xf32>
    %87 = vector.shape_cast %86 : vector<16xf32> to vector<16x1xf32>
    %88 = vector.broadcast %82 : f32 to vector<16x1xf32>
    %89 = arith.divf %88, %87 : vector<16x1xf32>
    %90 = vector.broadcast %89 : vector<16x1xf32> to vector<16x16xf32>
    %91 = arith.mulf %85, %90 : vector<16x16xf32>
    %92 = arith.addf %80, %91 : vector<16x16xf32>
    %c7 = arith.constant 7 : index
    %93 = memref.load %arg1[%c7] : memref<8xf32, #tpu.memory_space<smem>>
    %c7_14 = arith.constant 7 : index
    %94 = memref.load %arg2[%c7_14] : memref<8xf32, #tpu.memory_space<smem>>
    %95 = vector.broadcast %93 : f32 to vector<16x16xf32>
    %96 = arith.mulf %7, %95 : vector<16x16xf32>
    %97 = math.exp %96 : vector<16x16xf32>
    %cst_15 = arith.constant dense<0.000000e+00> : vector<16xf32>
    %98 = vector.multi_reduction <add>, %97, %cst_15 [1] : vector<16x16xf32> to vector<16xf32>
    %99 = vector.shape_cast %98 : vector<16xf32> to vector<16x1xf32>
    %100 = vector.broadcast %94 : f32 to vector<16x1xf32>
    %101 = arith.divf %100, %99 : vector<16x1xf32>
    %102 = vector.broadcast %101 : vector<16x1xf32> to vector<16x16xf32>
    %103 = arith.mulf %97, %102 : vector<16x16xf32>
    %104 = arith.addf %92, %103 : vector<16x16xf32>
    %c0_16 = arith.constant 0 : index
    %c0_17 = arith.constant 0 : index
    %105 = vector.load %arg3[%c0_16, %c0_17] : memref<16x16xf32, #tpu.memory_space<vmem>>, vector<16x16xf32>
    tpu.vector_store %arg3[%c0_16, %c0_17], %104 {strides = array<i32>} : memref<16x16xf32, #tpu.memory_space<vmem>>, vector<16x16xf32>,
    return
  }
  func.func @transform_0(%arg0: i32) -> i32 {
    %c0_i32 = arith.constant 0 : i32
    %c0_i32_0 = arith.constant 0 : i32
    return %c0_i32 : i32
  }
  func.func @transform_1(%arg0: i32) -> i32 {
    %c0_i32 = arith.constant 0 : i32
    %c0_i32_0 = arith.constant 0 : i32
    return %c0_i32 : i32
  }
  func.func @transform_2(%arg0: i32) -> (i32, i32) {
    %c0_i32 = arith.constant 0 : i32
    %c0_i32_0 = arith.constant 0 : i32
    return %arg0, %c0_i32 : i32, i32
  }
}

</mosaic_0001>

<llo_original>
// kernel: tpu_custom_call.1
$region0: #{tpu_custom_call.1}
  #allocation0 [shape = 'u32[]', space=smem, size = 0x4, offset = 0x4, fixed_abs, tag = 'smem constant byte address 0x4 - core index']
  #allocation1 [shape = 'u32[72,128]{1,0:T(1,128)}', space=vmem, size = 0x9000, scoped, tag = 'internal scratch']
  %s0 = inlined_call_operand.hbm [shape: f32[8], index: 0, kind: input, shape index: {}]
  %s1 = inlined_call_operand.hbm [shape: f32[8], index: 1, kind: input, shape index: {}]
  %s2 = inlined_call_operand.hbm [shape: f32[16,16], index: 2, kind: output, shape index: {}]
  %s3 = sld [smem:[#allocation0]]
  $region26: #{tpu_custom_call.1} parent=0
    _
  %s5 = ssub.s32 1, %s3
  %s6 = scalar_select 0, %s5, %s3
  $region1: #{tpu_custom_call.1} parent=0
    #allocation2 [shape = 'u8[512]{0}', space=smem, size = 0x200, scoped, tag = 'input window, operand 0, single buffered']
    #allocation3 [shape = 's32[1]{0}', space=sflag, size = 0x4, scoped, tag = 'scoped memory for tpu_custom_call.1']
    #allocation4 [shape = 's32[1]{0}', space=sflag, size = 0x4, scoped, tag = 'scoped memory for tpu_custom_call.1']
    #allocation5 [shape = 'u8[512]{0}', space=smem, size = 0x200, scoped, tag = 'input window, operand 1, single buffered']
    #allocation6 [shape = 's32[1]{0}', space=sflag, size = 0x4, scoped, tag = 'scoped memory for tpu_custom_call.1']
    #allocation7 [shape = 'u8[8192]{0}', space=vmem, size = 0x2000, scoped, tag = 'output window, operand 0, single buffered']
    %7 = vsyncpa [#allocation4], 0
    %8 = vsyncpa [#allocation6], 0
    %9 = vsyncpa [#allocation3], 0
    // Predicated region
    $region2: #{tpu_custom_call.1} parent=1 // pred_check
      _
    $region3: #{tpu_custom_call.1} parent=1 // pred_check_branch
      %11 = sbr.rel (0) target = $region5
    $region4: #{tpu_custom_call.1} parent=1 // pred_region
      %13 = vsyncadd [#allocation4], 0
      %s15 = sshll.u32 %s0, 4
      %s16 = int_to_ptr.hbm [resolvable:$true] %s15
      %18 = dma.hbm_to_smem %s16, 16, [#allocation2], [#allocation4]
    $region5: #{tpu_custom_call.1} parent=1 // pred_fallthru
      _
    // Predicated region
    $region6: #{tpu_custom_call.1} parent=1 // pred_check
      _
    $region7: #{tpu_custom_call.1} parent=1 // pred_check_branch
      %20 = sbr.rel (0) target = $region9
    $region8: #{tpu_custom_call.1} parent=1 // pred_region
      %22 = vsyncadd [#allocation6], 0
      %s24 = sshll.u32 %s1, 4
      %s25 = int_to_ptr.hbm [resolvable:$true] %s24
      %27 = dma.hbm_to_smem %s25, 16, [#allocation5], [#allocation6]
    $region9: #{tpu_custom_call.1} parent=1 // pred_fallthru
      _
    // Predicated region
    $region10: #{tpu_custom_call.1} parent=1 // pred_check
      _
    $region11: #{tpu_custom_call.1} parent=1 // pred_check_branch
      %29 = sbr.rel (0) target = $region13
    $region12: #{tpu_custom_call.1} parent=1 // pred_region
      %31 = dma.done [#allocation4], 16
    $region13: #{tpu_custom_call.1} parent=1 // pred_fallthru
      _
    // Predicated region
    $region14: #{tpu_custom_call.1} parent=1 // pred_check
      _
    $region15: #{tpu_custom_call.1} parent=1 // pred_check_branch
      %33 = sbr.rel (0) target = $region17
    $region16: #{tpu_custom_call.1} parent=1 // pred_region
      %35 = dma.done [#allocation6], 16
    $region17: #{tpu_custom_call.1} parent=1 // pred_fallthru
      _
    %36 = sfence
    %s37 = smul.u32 0, 16
    %v38 = vlaneseq
    %v39 = vshrl.u32 %v38, 7
    %v40 = vadd.s32 %v39, 8
    %v41 = vstv %s37
    %v42 = vadd.s32 %v39, %v41
    %v43 = vadd.s32 %v40, %v41
    %v44 = vlaneseq
    %v45 = vand.u32 %v44, 127
    %v46 = vsub.s32 %v42, %v45
    %v47 = vsub.s32 %v43, %v45
    %v48 = vcvt.s32.f32 %v46
    %v49 = vcvt.s32.f32 %v47
    %v50 = vmul.f32 %v48, %v48
    %v51 = vmul.f32 %v49, %v49
    %s52 = sld [smem:[#allocation2]]
    %s53 = sld [smem:[#allocation5]]
    %v54 = vstv %s52
    %v55 = vmul.f32 %v50, %v54
    %v56 = vmul.f32 %v51, %v54
    %v57 = vmul.f32 %v55, 1.442695
    %v58 = vpow.pop %v57
    %v59 = vmul.f32 %v56, 1.442695
    %v60 = vpow.pop %v59
    %vm61 = vcmask 130048
    %v62 = vsel %vm61, %v58, 0.0
    %63 = vadd.xlane.f32.xlu0 %v62
    %v64 = vpop.xlane.xlu0 %63
    %v65 = vsel %vm61, %v60, 0.0
    %66 = vadd.xlane.f32.xlu0 %v65
    %v67 = vpop.xlane.xlu0 %66
    %v68 = vstv %s53
    %v69 = vrcp.pop %v64
    %v70 = vmul.f32 %v64, %v69
    %v71 = vsub.f32 1.0, %v70
    %v72 = vmul.f32 %v69, %v71
    %v73 = vadd.f32 %v69, %v72
    %vm74 = vweird.f32 %v64
    %vm75 = vweird.f32 %v69
    %vm76 = vmor %vm74, %vm75
    %v77 = vsel %vm76, %v69, %v73
    %v78 = vand.u32 2147483647, %v64
    %vm79 = vcmp.eq.f32.partialorder %v78, 8.507059e+37
    %v80 = vand.u32 %v64, 2147483648
    %v81 = vor.u32 1.1754944e-38, %v80
    %v82 = vsel %vm79, %v81, %v77
    %v83 = vmul.f32 %v68, %v82
    %v84 = vrcp.pop %v67
    %v85 = vmul.f32 %v67, %v84
    %v86 = vsub.f32 1.0, %v85
    %v87 = vmul.f32 %v84, %v86
    %v88 = vadd.f32 %v84, %v87
    %vm89 = vweird.f32 %v67
    %vm90 = vweird.f32 %v84
    %vm91 = vmor %vm89, %vm90
    %v92 = vsel %vm91, %v84, %v88
    %v93 = vand.u32 2147483647, %v67
    %vm94 = vcmp.eq.f32.partialorder %v93, 8.507059e+37
    %v95 = vand.u32 %v67, 2147483648
    %v96 = vor.u32 1.1754944e-38, %v95
    %v97 = vsel %vm94, %v96, %v92
    %v98 = vmul.f32 %v68, %v97
    %v99 = vmul.f32 %v58, %v83
    %v100 = vmul.f32 %v60, %v98
    %v101 = vadd.f32 %v99, 0.0
    %v102 = vadd.f32 %v100, 0.0
    %s103 = sld [smem:[#allocation2 + $0x1]]
    %s104 = sld [smem:[#allocation5 + $0x1]]
    %v105 = vstv %s103
    %v106 = vmul.f32 %v50, %v105
    %v107 = vmul.f32 %v51, %v105
    %v108 = vmul.f32 %v106, 1.442695
    %v109 = vpow.pop %v108
    %v110 = vmul.f32 %v107, 1.442695
    %v111 = vpow.pop %v110
    %v112 = vsel %vm61, %v109, 0.0
    %113 = vadd.xlane.f32.xlu0 %v112
    %v114 = vpop.xlane.xlu0 %113
    %v115 = vsel %vm61, %v111, 0.0
    %116 = vadd.xlane.f32.xlu0 %v115
    %v117 = vpop.xlane.xlu0 %116
    %v118 = vstv %s104
    %v119 = vrcp.pop %v114
    %v120 = vmul.f32 %v114, %v119
    %v121 = vsub.f32 1.0, %v120
    %v122 = vmul.f32 %v119, %v121
    %v123 = vadd.f32 %v119, %v122
    %vm124 = vweird.f32 %v114
    %vm125 = vweird.f32 %v119
    %vm126 = vmor %vm124, %vm125
    %v127 = vsel %vm126, %v119, %v123
    %v128 = vand.u32 2147483647, %v114
    %vm129 = vcmp.eq.f32.partialorder %v128, 8.507059e+37
    %v130 = vand.u32 %v114, 2147483648
    %v131 = vor.u32 1.1754944e-38, %v130
    %v132 = vsel %vm129, %v131, %v127
    %v133 = vmul.f32 %v118, %v132
    %v134 = vrcp.pop %v117
    %v135 = vmul.f32 %v117, %v134
    %v136 = vsub.f32 1.0, %v135
    %v137 = vmul.f32 %v134, %v136
    %v138 = vadd.f32 %v134, %v137
    %vm139 = vweird.f32 %v117
    %vm140 = vweird.f32 %v134
    %vm141 = vmor %vm139, %vm140
    %v142 = vsel %vm141, %v134, %v138
    %v143 = vand.u32 2147483647, %v117
    %vm144 = vcmp.eq.f32.partialorder %v143, 8.507059e+37
    %v145 = vand.u32 %v117, 2147483648
    %v146 = vor.u32 1.1754944e-38, %v145
    %v147 = vsel %vm144, %v146, %v142
    %v148 = vmul.f32 %v118, %v147
    %v149 = vmul.f32 %v109, %v133
    %v150 = vmul.f32 %v111, %v148
    %v151 = vadd.f32 %v101, %v149
    %v152 = vadd.f32 %v102, %v150
    %s153 = sld [smem:[#allocation2 + $0x2]]
    %s154 = sld [smem:[#allocation5 + $0x2]]
    %v155 = vstv %s153
    %v156 = vmul.f32 %v50, %v155
    %v157 = vmul.f32 %v51, %v155
    %v158 = vmul.f32 %v156, 1.442695
    %v159 = vpow.pop %v158
    %v160 = vmul.f32 %v157, 1.442695
    %v161 = vpow.pop %v160
    %v162 = vsel %vm61, %v159, 0.0
    %163 = vadd.xlane.f32.xlu0 %v162
    %v164 = vpop.xlane.xlu0 %163
    %v165 = vsel %vm61, %v161, 0.0
    %166 = vadd.xlane.f32.xlu0 %v165
    %v167 = vpop.xlane.xlu0 %166
    %v168 = vstv %s154
    %v169 = vrcp.pop %v164
    %v170 = vmul.f32 %v164, %v169
    %v171 = vsub.f32 1.0, %v170
    %v172 = vmul.f32 %v169, %v171
    %v173 = vadd.f32 %v169, %v172
    %vm174 = vweird.f32 %v164
    %vm175 = vweird.f32 %v169
    %vm176 = vmor %vm174, %vm175
    %v177 = vsel %vm176, %v169, %v173
    %v178 = vand.u32 2147483647, %v164
    %vm179 = vcmp.eq.f32.partialorder %v178, 8.507059e+37
    %v180 = vand.u32 %v164, 2147483648
    %v181 = vor.u32 1.1754944e-38, %v180
    %v182 = vsel %vm179, %v181, %v177
    %v183 = vmul.f32 %v168, %v182
    %v184 = vrcp.pop %v167
    %v185 = vmul.f32 %v167, %v184
    %v186 = vsub.f32 1.0, %v185
    %v187 = vmul.f32 %v184, %v186
    %v188 = vadd.f32 %v184, %v187
    %vm189 = vweird.f32 %v167
    %vm190 = vweird.f32 %v184
    %vm191 = vmor %vm189, %vm190
    %v192 = vsel %vm191, %v184, %v188
    %v193 = vand.u32 2147483647, %v167
    %vm194 = vcmp.eq.f32.partialorder %v193, 8.507059e+37
    %v195 = vand.u32 %v167, 2147483648
    %v196 = vor.u32 1.1754944e-38, %v195
    %v197 = vsel %vm194, %v196, %v192
    %v198 = vmul.f32 %v168, %v197
    %v199 = vmul.f32 %v159, %v183
    %v200 = vmul.f32 %v161, %v198
    %v201 = vadd.f32 %v151, %v199
    %v202 = vadd.f32 %v152, %v200
    %s203 = sld [smem:[#allocation2 + $0x3]]
    %s204 = sld [smem:[#allocation5 + $0x3]]
    %v205 = vstv %s203
    %v206 = vmul.f32 %v50, %v205
    %v207 = vmul.f32 %v51, %v205
    %v208 = vmul.f32 %v206, 1.442695
    %v209 = vpow.pop %v208
    %v210 = vmul.f32 %v207, 1.442695
    %v211 = vpow.pop %v210
    %v212 = vsel %vm61, %v209, 0.0
    %213 = vadd.xlane.f32.xlu0 %v212
    %v214 = vpop.xlane.xlu0 %213
    %v215 = vsel %vm61, %v211, 0.0
    %216 = vadd.xlane.f32.xlu0 %v215
    %v217 = vpop.xlane.xlu0 %216
    %v218 = vstv %s204
    %v219 = vrcp.pop %v214
    %v220 = vmul.f32 %v214, %v219
    %v221 = vsub.f32 1.0, %v220
    %v222 = vmul.f32 %v219, %v221
    %v223 = vadd.f32 %v219, %v222
    %vm224 = vweird.f32 %v214
    %vm225 = vweird.f32 %v219
    %vm226 = vmor %vm224, %vm225
    %v227 = vsel %vm226, %v219, %v223
    %v228 = vand.u32 2147483647, %v214
    %vm229 = vcmp.eq.f32.partialorder %v228, 8.507059e+37
    %v230 = vand.u32 %v214, 2147483648
    %v231 = vor.u32 1.1754944e-38, %v230
    %v232 = vsel %vm229, %v231, %v227
    %v233 = vmul.f32 %v218, %v232
    %v234 = vrcp.pop %v217
    %v235 = vmul.f32 %v217, %v234
    %v236 = vsub.f32 1.0, %v235
    %v237 = vmul.f32 %v234, %v236
    %v238 = vadd.f32 %v234, %v237
    %vm239 = vweird.f32 %v217
    %vm240 = vweird.f32 %v234
    %vm241 = vmor %vm239, %vm240
    %v242 = vsel %vm241, %v234, %v238
    %v243 = vand.u32 2147483647, %v217
    %vm244 = vcmp.eq.f32.partialorder %v243, 8.507059e+37
    %v245 = vand.u32 %v217, 2147483648
    %v246 = vor.u32 1.1754944e-38, %v245
    %v247 = vsel %vm244, %v246, %v242
    %v248 = vmul.f32 %v218, %v247
    %v249 = vmul.f32 %v209, %v233
    %v250 = vmul.f32 %v211, %v248
    %v251 = vadd.f32 %v201, %v249
    %v252 = vadd.f32 %v202, %v250
    %s253 = sld [smem:[#allocation2 + $0x4]]
    %s254 = sld [smem:[#allocation5 + $0x4]]
    %v255 = vstv %s253
    %v256 = vmul.f32 %v50, %v255
    %v257 = vmul.f32 %v51, %v255
    %v258 = vmul.f32 %v256, 1.442695
    %v259 = vpow.pop %v258
    %v260 = vmul.f32 %v257, 1.442695
    %v261 = vpow.pop %v260
    %v262 = vsel %vm61, %v259, 0.0
    %263 = vadd.xlane.f32.xlu0 %v262
    %v264 = vpop.xlane.xlu0 %263
    %v265 = vsel %vm61, %v261, 0.0
    %266 = vadd.xlane.f32.xlu0 %v265
    %v267 = vpop.xlane.xlu0 %266
    %v268 = vstv %s254
    %v269 = vrcp.pop %v264
    %v270 = vmul.f32 %v264, %v269
    %v271 = vsub.f32 1.0, %v270
    %v272 = vmul.f32 %v269, %v271
    %v273 = vadd.f32 %v269, %v272
    %vm274 = vweird.f32 %v264
    %vm275 = vweird.f32 %v269
    %vm276 = vmor %vm274, %vm275
    %v277 = vsel %vm276, %v269, %v273
    %v278 = vand.u32 2147483647, %v264
    %vm279 = vcmp.eq.f32.partialorder %v278, 8.507059e+37
    %v280 = vand.u32 %v264, 2147483648
    %v281 = vor.u32 1.1754944e-38, %v280
    %v282 = vsel %vm279, %v281, %v277
    %v283 = vmul.f32 %v268, %v282
    %v284 = vrcp.pop %v267
    %v285 = vmul.f32 %v267, %v284
    %v286 = vsub.f32 1.0, %v285
    %v287 = vmul.f32 %v284, %v286
    %v288 = vadd.f32 %v284, %v287
    %vm289 = vweird.f32 %v267
    %vm290 = vweird.f32 %v284
    %vm291 = vmor %vm289, %vm290
    %v292 = vsel %vm291, %v284, %v288
    %v293 = vand.u32 2147483647, %v267
    %vm294 = vcmp.eq.f32.partialorder %v293, 8.507059e+37
    %v295 = vand.u32 %v267, 2147483648
    %v296 = vor.u32 1.1754944e-38, %v295
    %v297 = vsel %vm294, %v296, %v292
    %v298 = vmul.f32 %v268, %v297
    %v299 = vmul.f32 %v259, %v283
    %v300 = vmul.f32 %v261, %v298
    %v301 = vadd.f32 %v251, %v299
    %v302 = vadd.f32 %v252, %v300
    %s303 = sld [smem:[#allocation2 + $0x5]]
    %s304 = sld [smem:[#allocation5 + $0x5]]
    %v305 = vstv %s303
    %v306 = vmul.f32 %v50, %v305
    %v307 = vmul.f32 %v51, %v305
    %v308 = vmul.f32 %v306, 1.442695
    %v309 = vpow.pop %v308
    %v310 = vmul.f32 %v307, 1.442695
    %v311 = vpow.pop %v310
    %v312 = vsel %vm61, %v309, 0.0
    %313 = vadd.xlane.f32.xlu0 %v312
    %v314 = vpop.xlane.xlu0 %313
    %v315 = vsel %vm61, %v311, 0.0
    %316 = vadd.xlane.f32.xlu0 %v315
    %v317 = vpop.xlane.xlu0 %316
    %v318 = vstv %s304
    %v319 = vrcp.pop %v314
    %v320 = vmul.f32 %v314, %v319
    %v321 = vsub.f32 1.0, %v320
    %v322 = vmul.f32 %v319, %v321
    %v323 = vadd.f32 %v319, %v322
    %vm324 = vweird.f32 %v314
    %vm325 = vweird.f32 %v319
    %vm326 = vmor %vm324, %vm325
    %v327 = vsel %vm326, %v319, %v323
    %v328 = vand.u32 2147483647, %v314
    %vm329 = vcmp.eq.f32.partialorder %v328, 8.507059e+37
    %v330 = vand.u32 %v314, 2147483648
    %v331 = vor.u32 1.1754944e-38, %v330
    %v332 = vsel %vm329, %v331, %v327
    %v333 = vmul.f32 %v318, %v332
    %v334 = vrcp.pop %v317
    %v335 = vmul.f32 %v317, %v334
    %v336 = vsub.f32 1.0, %v335
    %v337 = vmul.f32 %v334, %v336
    %v338 = vadd.f32 %v334, %v337
    %vm339 = vweird.f32 %v317
    %vm340 = vweird.f32 %v334
    %vm341 = vmor %vm339, %vm340
    %v342 = vsel %vm341, %v334, %v338
    %v343 = vand.u32 2147483647, %v317
    %vm344 = vcmp.eq.f32.partialorder %v343, 8.507059e+37
    %v345 = vand.u32 %v317, 2147483648
    %v346 = vor.u32 1.1754944e-38, %v345
    %v347 = vsel %vm344, %v346, %v342
    %v348 = vmul.f32 %v318, %v347
    %v349 = vmul.f32 %v309, %v333
    %v350 = vmul.f32 %v311, %v348
    %v351 = vadd.f32 %v301, %v349
    %v352 = vadd.f32 %v302, %v350
    %s353 = sld [smem:[#allocation2 + $0x6]]
    %s354 = sld [smem:[#allocation5 + $0x6]]
    %v355 = vstv %s353
    %v356 = vmul.f32 %v50, %v355
    %v357 = vmul.f32 %v51, %v355
    %v358 = vmul.f32 %v356, 1.442695
    %v359 = vpow.pop %v358
    %v360 = vmul.f32 %v357, 1.442695
    %v361 = vpow.pop %v360
    %v362 = vsel %vm61, %v359, 0.0
    %363 = vadd.xlane.f32.xlu0 %v362
    %v364 = vpop.xlane.xlu0 %363
    %v365 = vsel %vm61, %v361, 0.0
    %366 = vadd.xlane.f32.xlu0 %v365
    %v367 = vpop.xlane.xlu0 %366
    %v368 = vstv %s354
    %v369 = vrcp.pop %v364
    %v370 = vmul.f32 %v364, %v369
    %v371 = vsub.f32 1.0, %v370
    %v372 = vmul.f32 %v369, %v371
    %v373 = vadd.f32 %v369, %v372
    %vm374 = vweird.f32 %v364
    %vm375 = vweird.f32 %v369
    %vm376 = vmor %vm374, %vm375
    %v377 = vsel %vm376, %v369, %v373
    %v378 = vand.u32 2147483647, %v364
    %vm379 = vcmp.eq.f32.partialorder %v378, 8.507059e+37
    %v380 = vand.u32 %v364, 2147483648
    %v381 = vor.u32 1.1754944e-38, %v380
    %v382 = vsel %vm379, %v381, %v377
    %v383 = vmul.f32 %v368, %v382
    %v384 = vrcp.pop %v367
    %v385 = vmul.f32 %v367, %v384
    %v386 = vsub.f32 1.0, %v385
    %v387 = vmul.f32 %v384, %v386
    %v388 = vadd.f32 %v384, %v387
    %vm389 = vweird.f32 %v367
    %vm390 = vweird.f32 %v384
    %vm391 = vmor %vm389, %vm390
    %v392 = vsel %vm391, %v384, %v388
    %v393 = vand.u32 2147483647, %v367
    %vm394 = vcmp.eq.f32.partialorder %v393, 8.507059e+37
    %v395 = vand.u32 %v367, 2147483648
    %v396 = vor.u32 1.1754944e-38, %v395
    %v397 = vsel %vm394, %v396, %v392
    %v398 = vmul.f32 %v368, %v397
    %v399 = vmul.f32 %v359, %v383
    %v400 = vmul.f32 %v361, %v398
    %v401 = vadd.f32 %v351, %v399
    %v402 = vadd.f32 %v352, %v400
    %s403 = sld [smem:[#allocation2 + $0x7]]
    %s404 = sld [smem:[#allocation5 + $0x7]]
    %v405 = vstv %s403
    %v406 = vmul.f32 %v50, %v405
    %v407 = vmul.f32 %v51, %v405
    %v408 = vmul.f32 %v406, 1.442695
    %v409 = vpow.pop %v408
    %v410 = vmul.f32 %v407, 1.442695
    %v411 = vpow.pop %v410
    %v412 = vsel %vm61, %v409, 0.0
    %413 = vadd.xlane.f32.xlu0 %v412
    %v414 = vpop.xlane.xlu0 %413
    %v415 = vsel %vm61, %v411, 0.0
    %416 = vadd.xlane.f32.xlu0 %v415
    %v417 = vpop.xlane.xlu0 %416
    %v418 = vstv %s404
    %v419 = vrcp.pop %v414
    %v420 = vmul.f32 %v414, %v419
    %v421 = vsub.f32 1.0, %v420
    %v422 = vmul.f32 %v419, %v421
    %v423 = vadd.f32 %v419, %v422
    %vm424 = vweird.f32 %v414
    %vm425 = vweird.f32 %v419
    %vm426 = vmor %vm424, %vm425
    %v427 = vsel %vm426, %v419, %v423
    %v428 = vand.u32 2147483647, %v414
    %vm429 = vcmp.eq.f32.partialorder %v428, 8.507059e+37
    %v430 = vand.u32 %v414, 2147483648
    %v431 = vor.u32 1.1754944e-38, %v430
    %v432 = vsel %vm429, %v431, %v427
    %v433 = vmul.f32 %v418, %v432
    %v434 = vrcp.pop %v417
    %v435 = vmul.f32 %v417, %v434
    %v436 = vsub.f32 1.0, %v435
    %v437 = vmul.f32 %v434, %v436
    %v438 = vadd.f32 %v434, %v437
    %vm439 = vweird.f32 %v417
    %vm440 = vweird.f32 %v434
    %vm441 = vmor %vm439, %vm440
    %v442 = vsel %vm441, %v434, %v438
    %v443 = vand.u32 2147483647, %v417
    %vm444 = vcmp.eq.f32.partialorder %v443, 8.507059e+37
    %v445 = vand.u32 %v417, 2147483648
    %v446 = vor.u32 1.1754944e-38, %v445
    %v447 = vsel %vm444, %v446, %v442
    %v448 = vmul.f32 %v418, %v447
    %v449 = vmul.f32 %v409, %v433
    %v450 = vmul.f32 %v411, %v448
    %v451 = vadd.f32 %v401, %v449
    %v452 = vadd.f32 %v402, %v450
    %453 = vst.msk [vmem:[#allocation7] sm:$0xff] %vm61, %v451
    %454 = vst.msk [vmem:[#allocation7 + $0x8] sm:$0xff] %vm61, %v452
    // Predicated region
    $region18: #{tpu_custom_call.1} parent=1 // pred_check
      _
    $region19: #{tpu_custom_call.1} parent=1 // pred_check_branch
      %456 = sbr.rel (0) target = $region21
    $region20: #{tpu_custom_call.1} parent=1 // pred_region
      %458 = vsyncadd [#allocation3], 0
      %s459 = sshll.u32 [#allocation7], 4
      %s460 = int_to_ptr.vmem [resolvable:$true] %s459
      %s461 = sshll.u32 %s2, 4
      %s462 = int_to_ptr.hbm [resolvable:$true] %s461
      %467 = dma.vmem_to_hbm [thread:$0]  %s460, 256, %s462, [#allocation3], 128, 128, 8
    $region21: #{tpu_custom_call.1} parent=1 // pred_fallthru
      _
    // Predicated region
    $region22: #{tpu_custom_call.1} parent=1 // pred_check
      _
    $region23: #{tpu_custom_call.1} parent=1 // pred_check_branch
      %469 = sbr.rel (0) target = $region25
    $region24: #{tpu_custom_call.1} parent=1 // pred_region
      %471 = dma.done [#allocation3], 256
    $region25: #{tpu_custom_call.1} parent=1 // pred_fallthru
      _
    %472 = vsyncpa [#allocation3], 1
    %473 = vsyncpa [#allocation4], 1
    %474 = vsyncpa [#allocation6], 1

</llo_original>
